<compile_context>
chip_gen: v7x
topology: tpu7x:2x2x1
jax: 0.10.0
libtpu: 0.0.40
codegen_flags: <defaults>
</compile_context>

<pallas_src>
import functools

import jax
import jax.numpy as jnp
from jax.experimental import pallas as pl
from jax.experimental.pallas import tpu as pltpu

_LANES = 128


# ----------------------------------------------------------------------------
# Kernels
# ----------------------------------------------------------------------------
def _tile_nll(logits_ref, targets_ref):
    """Per-row NLL for one (T, C) tile; returns a (T, 1) float32 column.

    logits_ref : (T, C) native-dtype VMEM ref (rows on sublanes, classes on lanes)
    targets_ref: (T, 1) int32 VMEM ref
    """
    x = logits_ref[...].astype(jnp.float32)                       # (T, C)
    t = targets_ref[...]                                          # (T, 1)
    tn, c = x.shape

    # numerically-stable log-softmax over the class (lane) axis
    m = jnp.max(x, axis=-1, keepdims=True)                        # (T, 1)
    z = x - m
    lse = jnp.log(jnp.sum(jnp.exp(z), axis=-1, keepdims=True))    # (T, 1)

    # gather the target logit via predicated select (no int->f32 cast, no mul)
    cls = jax.lax.broadcasted_iota(jnp.int32, (tn, c), 1)         # (T, C)
    tgt = jnp.sum(jnp.where(cls == t, z, jnp.float32(0.0)),
                  axis=-1, keepdims=True)                         # (T, 1)
    return lse - tgt                                              # (T, 1)


def _ce_kernel_none(logits_ref, targets_ref, out_ref):
    """reduction='none': per-row NLL column; OOB rows of the last tile are
    dropped by the masked output writeback."""
    out_ref[...] = _tile_nll(logits_ref, targets_ref)


def _ce_kernel_partial(logits_ref, targets_ref, out_ref, *,
                       n_total: int, tile_n: int):
    """reduction='sum'/'mean': independent per-tile partial sum.

    out_ref: (1, 128) float32 block; the partial lives in lane 0, other lanes 0,
    so the wrapper can finish with a plain jnp.sum over all partial blocks.
    """
    nll = _tile_nll(logits_ref, targets_ref)                      # (T, 1)
    tn = nll.shape[0]
    lane = jax.lax.broadcasted_iota(jnp.int32, (1, _LANES), 1)

    def _store(v):
        s = jnp.sum(v, axis=0, keepdims=True)                     # (1, 1)
        out_ref[...] = jnp.where(lane == 0, s, jnp.float32(0.0))  # lane-dense store

    if n_total % tile_n == 0:
        # no padded rows anywhere -> no masking code at all
        _store(nll)
    else:
        i = pl.program_id(0)
        last = pl.num_programs(0) - 1

        @pl.when(i != last)
        def _():
            _store(nll)

        @pl.when(i == last)
        def _():
            # mask rows beyond the true row count (padded last tile only)
            row = jax.lax.broadcasted_iota(jnp.int32, (tn, 1), 0) + i * tile_n
            _store(jnp.where(row < n_total, nll, jnp.float32(0.0)))


# ----------------------------------------------------------------------------
# Wrapper
# ----------------------------------------------------------------------------
def _pick_tile_n(n: int, c: int, logits_itemsize: int, keep_rows: bool) -> int:
    """Row tile from a VMEM budget that counts the true lane-padded footprint.

    The minor (class) dim of every block pads to 128 lanes in VMEM, so the
    per-row VMEM cost is 128-lane based even when C is small.  Budget covers
    2x double-buffered logits + targets (+ per-row output for 'none') and is
    sized to stay comfortably under v7x's 64 MiB physical VMEM.
    """
    c_lanes = ((c + _LANES - 1) // _LANES) * _LANES
    per_row = c_lanes * logits_itemsize          # logits block
    per_row += _LANES * 4                        # (tile_n, 1) int32 targets (lane-padded)
    if keep_rows:
        per_row += _LANES * 4                    # (tile_n, 1) f32 per-row NLL output
    budget = 24 * 1024 * 1024                    # total block VMEM incl. double buffering
    t = budget // (2 * per_row)
    t = max(_LANES, (t // _LANES) * _LANES)
    t = min(t, 32768)                            # raised cap (was 2048)
    return n if t >= n else t


def _cross_entropy_pallas(logits: jnp.ndarray,
                          targets: jnp.ndarray,
                          reduction: str,
                          *,
                          tile_n: int | None = None) -> jnp.ndarray:
    n, c = logits.shape

    # Cheap layout plumbing only (N int32s); the big logits array is untouched.
    targets_col = targets.astype(jnp.int32).reshape(n, 1)

    if tile_n is None:
        tile_n = _pick_tile_n(n, c, jnp.dtype(logits.dtype).itemsize,
                              reduction == "none")
    if tile_n >= n:
        tile_n = n
    else:
        assert tile_n % _LANES == 0, "row tile must be a multiple of 128"

    grid_n = pl.cdiv(n, tile_n)

    in_specs = [
        pl.BlockSpec((tile_n, c), lambda i: (i, 0)),               # native logits tile
        pl.BlockSpec((tile_n, 1), lambda i: (i, 0)),               # targets column
    ]

    if reduction == "none":
        kernel = _ce_kernel_none
        out_shape = jax.ShapeDtypeStruct((n, 1), jnp.float32)
        out_spec = pl.BlockSpec((tile_n, 1), lambda i: (i, 0))
    else:
        kernel = functools.partial(_ce_kernel_partial, n_total=n, tile_n=tile_n)
        out_shape = jax.ShapeDtypeStruct((1, grid_n * _LANES), jnp.float32)
        out_spec = pl.BlockSpec((1, _LANES), lambda i: (0, i))     # per-tile partials

    out = pl.pallas_call(
        kernel,
        out_shape=out_shape,
        grid_spec=pltpu.PrefetchScalarGridSpec(
            num_scalar_prefetch=0,
            grid=(grid_n,),
            in_specs=in_specs,
            out_specs=out_spec,
        ),
        compiler_params=pltpu.CompilerParams(
            dimension_semantics=("parallel",),                     # megacore / v7x 2-TC
            vmem_limit_bytes=48 * 1024 * 1024,
        ),
    )(logits, targets_col)

    if reduction == "none":
        return out.reshape(n)
    total = jnp.sum(out)                                           # trivial final reduce
    if reduction == "mean":
        total = total / jnp.float32(n)
    return total


class MultipleChoiceHeadLoss:
    """JAX/Pallas port of the PyTorch MultipleChoiceHeadLoss module."""

    def __init__(self, reduction: str = "mean"):
        assert reduction in ("none", "mean", "sum")
        self.reduction = reduction

    def __call__(self, logits, targets):
        if logits.ndim == 1:
            if targets.ndim != 0:
                raise RuntimeError(
                    f"For single image, targets should be scalar, got shape {targets.shape}")
            logits = logits[None, :]
            targets = targets[None]
        elif logits.shape[0] != targets.shape[0]:
            raise RuntimeError(
                f"Batch size mismatch: logits {logits.shape[0]} vs targets {targets.shape[0]}")
        return _cross_entropy_pallas(logits, targets, self.reduction)


# ----------------------------------------------------------------------------
# Pure-JAX reference + demo
# ----------------------------------------------------------------------------
def _reference_ce(logits, targets, reduction="mean"):
    logp = jax.nn.log_softmax(logits.astype(jnp.float32), axis=-1)
    nll = -jnp.take_along_axis(logp, targets.astype(jnp.int32)[:, None], axis=-1)[:, 0]
    if reduction == "none":
        return nll
    if reduction == "sum":
        return jnp.sum(nll)
    return jnp.mean(nll)


if __name__ == "__main__":
    key = jax.random.PRNGKey(0)
    k1, k2, k3, k4, k5, k6 = jax.random.split(key, 6)

    # --- batch path, small odd shapes (single full-extent block) ---
    B, C = 6, 20
    logits = jax.random.normal(k1, (B, C), dtype=jnp.float32)
    targets = jax.random.randint(k2, (B,), 0, C, dtype=jnp.int32)
    for red in ("mean", "sum", "none"):
        out = jax.block_until_ready(MultipleChoiceHeadLoss(red)(logits, targets))
        ref = _reference_ce(logits, targets, red)
        assert jnp.allclose(out, ref, atol=1e-4, rtol=1e-5), (red, out, ref)

    # --- larger batch, forced row tile -> 3 grid steps, padded last tile ---
    B2, C2 = 300, 32
    logits2 = jax.random.normal(k3, (B2, C2), dtype=jnp.float32)
    targets2 = jax.random.randint(k4, (B2,), 0, C2, dtype=jnp.int32)
    for red in ("mean", "sum", "none"):
        out = jax.block_until_ready(
            _cross_entropy_pallas(logits2, targets2, red, tile_n=128))
        ref = _reference_ce(logits2, targets2, red)
        assert jnp.allclose(out, ref, atol=1e-4, rtol=1e-5), (red, out, ref)

    # --- single-image path: logits (Nr,), scalar target ---
    Nr = 17
    logits1 = jax.random.normal(k5, (Nr,), dtype=jnp.float32)
    target1 = jnp.array(3, dtype=jnp.int32)
    out = jax.block_until_ready(MultipleChoiceHeadLoss("mean")(logits1, target1))
    ref = _reference_ce(logits1[None, :], target1[None], "mean")
    assert jnp.allclose(out, ref, atol=1e-5, rtol=1e-5), (out, ref)

    # --- bf16 logits: no wrapper upcast, f32 math inside the kernel ---
    Bb, Cb = 64, 32
    logits_bf = jax.random.normal(k6, (Bb, Cb), dtype=jnp.float32).astype(jnp.bfloat16)
    targets_bf = jax.random.randint(k2, (Bb,), 0, Cb, dtype=jnp.int32)
    out = jax.block_until_ready(MultipleChoiceHeadLoss("mean")(logits_bf, targets_bf))
    ref = _reference_ce(logits_bf.astype(jnp.float32), targets_bf, "mean")
    assert jnp.allclose(out, ref, atol=1e-3, rtol=1e-3), (out, ref)

    print("KERNEL_OK")
</pallas_src>

<mosaic_0001>
module attributes {stable_mosaic.version = 11 : i64} {
  func.func @_ce_kernel_partial(%arg0: i32, %arg1: memref<6x20xf32, #tpu.memory_space<vmem>>, %arg2: memref<6x1xi32, #tpu.memory_space<vmem>>, %arg3: memref<1x128xf32, #tpu.memory_space<vmem>>) attributes {dimension_semantics = [#tpu.dimension_semantics<parallel>], iteration_bounds = array<i64: 1>, scalar_prefetch = 0 : i64, scratch_operands = 0 : i64, tpu.core_type = #tpu.core_type<tc>, window_params = [{transform_indices = @transform_0, window_bounds = array<i64: 6, 20>}, {transform_indices = @transform_1, window_bounds = array<i64: 6, 1>}, {transform_indices = @transform_2, window_bounds = array<i64: 1, 128>}]} {
    %c0 = arith.constant 0 : index
    %c0_0 = arith.constant 0 : index
    %0 = vector.load %arg1[%c0, %c0_0] : memref<6x20xf32, #tpu.memory_space<vmem>>, vector<6x20xf32>
    %c0_1 = arith.constant 0 : index
    %c0_2 = arith.constant 0 : index
    %1 = vector.load %arg2[%c0_1, %c0_2] : memref<6x1xi32, #tpu.memory_space<vmem>>, vector<6x1xi32>
    %cst = arith.constant dense<0xFF800000> : vector<6xf32>
    %2 = vector.multi_reduction <maximumf>, %0, %cst [1] : vector<6x20xf32> to vector<6xf32>
    %3 = vector.shape_cast %2 : vector<6xf32> to vector<6x1xf32>
    %4 = vector.broadcast %3 : vector<6x1xf32> to vector<6x20xf32>
    %5 = arith.subf %0, %4 : vector<6x20xf32>
    %6 = math.exp %5 : vector<6x20xf32>
    %cst_3 = arith.constant dense<0.000000e+00> : vector<6xf32>
    %7 = vector.multi_reduction <add>, %6, %cst_3 [1] : vector<6x20xf32> to vector<6xf32>
    %8 = vector.shape_cast %7 : vector<6xf32> to vector<6x1xf32>
    %9 = math.log %8 : vector<6x1xf32>
    %10 = tpu.iota {dimensions = array<i32: 1>} : vector<6x20xi32>
    %11 = vector.broadcast %1 : vector<6x1xi32> to vector<6x20xi32>
    %12 = arith.cmpi eq, %10, %11 : vector<6x20xi32>
    %cst_4 = arith.constant 0.000000e+00 : f32
    %13 = vector.broadcast %cst_4 : f32 to vector<6x20xf32>
    %14 = arith.select %12, %5, %13 : vector<6x20xi1>, vector<6x20xf32>
    %cst_5 = arith.constant dense<0.000000e+00> : vector<6xf32>
    %15 = vector.multi_reduction <add>, %14, %cst_5 [1] : vector<6x20xf32> to vector<6xf32>
    %16 = vector.shape_cast %15 : vector<6xf32> to vector<6x1xf32>
    %17 = arith.subf %9, %16 : vector<6x1xf32>
    %18 = tpu.iota {dimensions = array<i32: 1>} : vector<1x128xi32>
    %cst_6 = arith.constant dense<0.000000e+00> : vector<1xf32>
    %19 = vector.multi_reduction <add>, %17, %cst_6 [0] : vector<6x1xf32> to vector<1xf32>
    %20 = vector.shape_cast %19 : vector<1xf32> to vector<1x1xf32>
    %c0_i32 = arith.constant 0 : i32
    %21 = vector.broadcast %c0_i32 : i32 to vector<1x128xi32>
    %22 = arith.cmpi eq, %18, %21 : vector<1x128xi32>
    %cst_7 = arith.constant 0.000000e+00 : f32
    %23 = vector.shape_cast %20 : vector<1x1xf32> to vector<1x1xf32>
    %24 = vector.broadcast %23 : vector<1x1xf32> to vector<1x128xf32>
    %25 = vector.broadcast %cst_7 : f32 to vector<1x128xf32>
    %26 = arith.select %22, %24, %25 : vector<1x128xi1>, vector<1x128xf32>
    %c0_8 = arith.constant 0 : index
    %c0_9 = arith.constant 0 : index
    %27 = vector.load %arg3[%c0_8, %c0_9] : memref<1x128xf32, #tpu.memory_space<vmem>>, vector<1x128xf32>
    tpu.vector_store %arg3[%c0_8, %c0_9], %26 {strides = array<i32>} : memref<1x128xf32, #tpu.memory_space<vmem>>, vector<1x128xf32>,
    return
  }
  func.func @transform_0(%arg0: i32) -> (i32, i32) {
    %c0_i32 = arith.constant 0 : i32
    %c0_i32_0 = arith.constant 0 : i32
    return %arg0, %c0_i32 : i32, i32
  }
  func.func @transform_1(%arg0: i32) -> (i32, i32) {
    %c0_i32 = arith.constant 0 : i32
    %c0_i32_0 = arith.constant 0 : i32
    return %arg0, %c0_i32 : i32, i32
  }
  func.func @transform_2(%arg0: i32) -> (i32, i32) {
    %c0_i32 = arith.constant 0 : i32
    %c0_i32_0 = arith.constant 0 : i32
    return %c0_i32, %arg0 : i32, i32
  }
}

</mosaic_0001>

<llo_original>
// kernel: tpu_custom_call.1
$region0: #{tpu_custom_call.1}
  #allocation0 [shape = 'u32[]', space=smem, size = 0x4, offset = 0x4, fixed_abs, tag = 'smem constant byte address 0x4 - core index']
  #allocation1 [shape = 'u32[144,128]{1,0:T(1,128)}', space=vmem, size = 0x12000, scoped, tag = 'internal scratch']
  %s0 = inlined_call_operand.vmem [shape: f32[6,20], index: 0, kind: input, shape index: {}]
  %s1 = inlined_call_operand.vmem [shape: s32[6,1], index: 1, kind: input, shape index: {}]
  %s2 = inlined_call_operand.hbm [shape: f32[1,128], index: 2, kind: output, shape index: {}]
  %s3 = sld [smem:[#allocation0]]
  $region18: #{tpu_custom_call.1} parent=0
    _
  %s5 = ssub.s32 1, %s3
  %s6 = scalar_select 0, %s5, %s3
  $region1: #{tpu_custom_call.1} parent=0
    #allocation2 [shape = 'u8[512]{0}', space=vmem, size = 0x400, scoped, tag = 'output window, operand 0, single buffered']
    #allocation3 [shape = 's32[1]{0}', space=sflag, size = 0x4, scoped, tag = 'scoped memory for tpu_custom_call.1']
    %7 = vsyncpa [#allocation3], 0
    // Predicated region
    $region2: #{tpu_custom_call.1} parent=1 // pred_check
      _
    $region3: #{tpu_custom_call.1} parent=1 // pred_check_branch
      %9 = sbr.rel (0) target = $region5
    $region4: #{tpu_custom_call.1} parent=1 // pred_region
      _
    $region5: #{tpu_custom_call.1} parent=1 // pred_fallthru
      _
    // Predicated region
    $region6: #{tpu_custom_call.1} parent=1 // pred_check
      _
    $region7: #{tpu_custom_call.1} parent=1 // pred_check_branch
      %11 = sbr.rel (0) target = $region9
    $region8: #{tpu_custom_call.1} parent=1 // pred_region
      _
    $region9: #{tpu_custom_call.1} parent=1 // pred_fallthru
      _
    %v12 = vld [vmem:[%s0] sm:$0x3f]
    %v13 = vld [vmem:[%s1] sm:$0x3f]
    %vm14 = vcmask 160768
    %v15 = vsel %vm14, %v12, -inf
    %16 = vmax.xlane.f32.xlu0 %v15
    %v17 = vpop.xlane.xlu0 %16
    %v18 = vsub.f32 %v12, %v17
    %v19 = vmul.f32 %v18, 1.442695
    %v20 = vpow.pop %v19
    %v21 = vsel %vm14, %v20, 0.0
    %22 = vadd.xlane.f32.xlu0 %v21
    %v23 = vpop.xlane.xlu0 %22
    %v24 = vlog2.pop %v23
    %v25 = vmul.f32 %v24, 0.6931472
    %v26 = vlaneseq
    %v27 = vand.u32 %v26, 127
    %28 = vset.pattern.permute.xlu0 0
    %29 = vperm.xlu0 %28, %v13
    %v30 = vpop.permute.xlu0 %29
    %vm31 = vcmp.eq.s32.totalorder %v27, %v30
    %v32 = vsel %vm31, %v18, 0.0
    %v33 = vsel %vm14, %v32, 0.0
    %34 = vadd.xlane.f32.xlu0 %v33
    %v35 = vpop.xlane.xlu0 %34
    %v36 = vsub.f32 %v25, %v35
    %vm37 = vcmask 1045504
    %v38 = vsel %vm37, %v36, 0.0
    %v39 = vrot.slane %v38, 4
    %v40 = vadd.f32 %v38, %v39
    %v41 = vrot.slane %v40, 2
    %v42 = vadd.f32 %v40, %v41
    %v43 = vrot.slane %v42, 1
    %v44 = vadd.f32 %v42, %v43
    %vm45 = vcmp.eq.s32.totalorder %v27, 0
    %v46 = vsel %vm45, %v44, 0.0
    %47 = vst [vmem:[#allocation2] sm:$0x1] %v46
    // Predicated region
    $region10: #{tpu_custom_call.1} parent=1 // pred_check
      _
    $region11: #{tpu_custom_call.1} parent=1 // pred_check_branch
      %49 = sbr.rel (0) target = $region13
    $region12: #{tpu_custom_call.1} parent=1 // pred_region
      %s51 = ssub.s32 16, 16
      %52 = vsyncadd [#allocation3], %s51
      %s54 = sshll.u32 [#allocation2], 4
      %s55 = int_to_ptr.vmem [resolvable:$true] %s54
      %57 = dma.vmem_to_hbm [thread:$0]  %s55, 16, %s2, [#allocation3]
    $region13: #{tpu_custom_call.1} parent=1 // pred_fallthru
      _
    // Predicated region
    $region14: #{tpu_custom_call.1} parent=1 // pred_check
      _
    $region15: #{tpu_custom_call.1} parent=1 // pred_check_branch
      %59 = sbr.rel (0) target = $region17
    $region16: #{tpu_custom_call.1} parent=1 // pred_region
      %60 = dma.done [#allocation3], 16
    $region17: #{tpu_custom_call.1} parent=1 // pred_fallthru
      _
    %61 = vsyncpa [#allocation3], 1

</llo_original>
